<compile_context>
chip_gen: v6e
topology: v6e:2x2x1
jax: 0.10.0
libtpu: 0.0.40
codegen_flags: <defaults>
</compile_context>

<pallas_src>
import jax
import jax.numpy as jnp
from jax.experimental import pallas as pl
from jax.experimental.pallas import tpu as pltpu

EPS = 1e-5


def _round_up(x, m):
    return (x + m - 1) // m * m


def _pad_to(a, shape):
    pads = [(0, s - d) for d, s in zip(a.shape, shape)]
    if all(p == (0, 0) for p in pads):
        return a
    return jnp.pad(a, pads)


def _bn_fold(h, gamma, beta):
    """Training-mode BatchNorm1d folded into one per-feature scale/shift.

    h: [N, F] fp32.  gamma/beta: [1, F] fp32.
    Stats use the two-pass centered form; the per-feature fold keeps the
    full-tile VPU work to a mul + add.  rsqrt goes to the EUP slot.

    NOTE: padded feature columns rely on gamma = beta = 0 padding: there
    var = 0 -> inv_std = 1/sqrt(eps), but scale = gamma*inv_std = 0 and
    shift = beta - mean*scale = 0, so padded lanes come out exactly 0.
    Do not change the padding values of gamma/beta.
    """
    mean = jnp.mean(h, axis=0, keepdims=True)               # [1, F]
    centered = h - mean
    var = jnp.mean(centered * centered, axis=0, keepdims=True)
    inv_std = jax.lax.rsqrt(var + EPS)                       # EUP
    scale = gamma * inv_std                                  # [1, F]
    shift = beta - mean * scale                              # [1, F]
    return h * scale + shift


def projection_mlp_kernel(
    x_ref,                      # [N, in_dim]        fp32 (resident)
    w1_ref, g1_ref, be1_ref,    # [in_dim, th] bf16, [1, th] fp32, [1, th] fp32
    w2_ref, g2_ref, be2_ref,    # [th, out_p]  bf16, [1, out_p] fp32 x2
    out_ref,                    # [N, out_p]   fp32  (resident accumulator)
):
    j = pl.program_id(0)

    # ---- layer1 (this hidden tile): Linear (bias cancelled by BN) -> BN1 -> ReLU
    xb = x_ref[...].astype(jnp.bfloat16)
    h = jnp.dot(xb, w1_ref[...], preferred_element_type=jnp.float32)
    h = jnp.maximum(_bn_fold(h, g1_ref[...], be1_ref[...]), 0.0)

    # ---- layer2 partial: this hidden tile's contribution
    part = jnp.dot(
        h.astype(jnp.bfloat16), w2_ref[...], preferred_element_type=jnp.float32
    )

    @pl.when(j == 0)
    def _():
        out_ref[...] = part          # first tile: direct write, no zero-init pass

    @pl.when(j > 0)
    def _():
        out_ref[...] += part

    # ---- finalize: BN2 (no ReLU) in place on the resident output block
    @pl.when(j == pl.num_programs(0) - 1)
    def _():
        out_ref[...] = _bn_fold(out_ref[...], g2_ref[...], be2_ref[...])


def preprocess_params(params, *, tile_h=256):
    """One-time weight prep: pad to lane/tile-aligned shapes and cast to bf16.

    Hoisted out of the forward call so repeated calls don't re-stream the
    weights through HBM just to pad/cast them.
    """
    in_dim, hidden = params["w1"].shape
    out_dim = params["w2"].shape[1]
    hid_p = _round_up(hidden, tile_h)     # hidden padded to a multiple of the tile
    out_p = _round_up(out_dim, 128)       # lane-dense output (>= 128, x128)
    return {
        "w1":  _pad_to(params["w1"].astype(jnp.bfloat16), (in_dim, hid_p)),
        "g1":  _pad_to(params["g1"],  (1, hid_p)),   # zero padding (see _bn_fold note)
        "be1": _pad_to(params["be1"], (1, hid_p)),
        "w2":  _pad_to(params["w2"].astype(jnp.bfloat16), (hid_p, out_p)),
        "g2":  _pad_to(params["g2"],  (1, out_p)),
        "be2": _pad_to(params["be2"], (1, out_p)),
        "meta": dict(in_dim=in_dim, hidden=hidden, out_dim=out_dim,
                     hid_p=hid_p, out_p=out_p, tile_h=tile_h),
    }


def projection_mlp(x, prepped):
    """x: [N, in_dim] fp32 -> [N, out_dim] fp32 (training-mode BN forward)."""
    meta = prepped["meta"]
    n, in_dim = x.shape
    assert in_dim == meta["in_dim"]
    tile_h, hid_p, out_p = meta["tile_h"], meta["hid_p"], meta["out_p"]
    out_dim = meta["out_dim"]

    # VMEM budget: resident fp32 x + resident fp32 out (count x2 for safety) +
    # double-buffered bf16 weight tiles + small per-feature vectors, +25% headroom.
    x_bytes   = n * in_dim * 4
    out_bytes = n * out_p * 4
    w1_tile   = in_dim * tile_h * 2
    w2_tile   = tile_h * out_p * 2
    misc      = 4 * (tile_h + out_p) * 4
    needed = x_bytes + 2 * out_bytes + 2 * (w1_tile + w2_tile) + misc
    # Resident-batch BN design: x and out scale with N; must fit v7x's 64 MiB VMEM.
    # TODO(synk): for very large N, a two-pass (stats then apply) BN with N-tiling
    # would be needed; the current design deliberately keeps the batch resident.
    assert needed < (56 << 20), (
        "batch too large for the resident-batch BN design; "
        "a tiled-N variant with cross-tile BN stats is required"
    )
    vmem_limit = int(min(max(int(needed * 1.25) + (1 << 20), 16 << 20), 56 << 20))

    grid = (hid_p // tile_h,)

    y_p = pl.pallas_call(
        projection_mlp_kernel,
        out_shape=jax.ShapeDtypeStruct((n, out_p), jnp.float32),
        grid_spec=pltpu.PrefetchScalarGridSpec(
            num_scalar_prefetch=0,
            grid=grid,
            in_specs=[
                pl.BlockSpec((n, in_dim),      lambda j: (0, 0)),   # x (resident)
                pl.BlockSpec((in_dim, tile_h), lambda j: (0, j)),   # w1 col tile
                pl.BlockSpec((1, tile_h),      lambda j: (0, j)),   # gamma1
                pl.BlockSpec((1, tile_h),      lambda j: (0, j)),   # beta1
                pl.BlockSpec((tile_h, out_p),  lambda j: (j, 0)),   # w2 row tile
                pl.BlockSpec((1, out_p),       lambda j: (0, 0)),   # gamma2
                pl.BlockSpec((1, out_p),       lambda j: (0, 0)),   # beta2
            ],
            out_specs=pl.BlockSpec((n, out_p), lambda j: (0, 0)),   # resident acc
        ),
        compiler_params=pltpu.CompilerParams(
            # hidden-tile axis carries the layer-2 accumulator -> reduction axis
            dimension_semantics=("arbitrary",),
            vmem_limit_bytes=vmem_limit,
        ),
    )(x, prepped["w1"], prepped["g1"], prepped["be1"],
      prepped["w2"], prepped["g2"], prepped["be2"])

    return y_p[:, :out_dim]


def init_params(key, in_dim, hidden_dim, out_dim):
    k1, k2 = jax.random.split(key)
    # Linear weights stored [in, out] (transposed vs. PyTorch [out, in]).
    # b1/b2 are kept only for the fp32 reference (training-mode BN cancels them).
    return {
        "w1":  jax.random.normal(k1, (in_dim, hidden_dim), jnp.float32) * 0.05,
        "b1":  jnp.full((1, hidden_dim), 0.01, jnp.float32),
        "g1":  jnp.ones((1, hidden_dim), jnp.float32),
        "be1": jnp.zeros((1, hidden_dim), jnp.float32),
        "w2":  jax.random.normal(k2, (hidden_dim, out_dim), jnp.float32) * 0.05,
        "b2":  jnp.full((1, out_dim), -0.01, jnp.float32),
        "g2":  jnp.ones((1, out_dim), jnp.float32),
        "be2": jnp.zeros((1, out_dim), jnp.float32),
    }


def _bn_ref(h, g, b):
    m = h.mean(0, keepdims=True)
    v = ((h - m) ** 2).mean(0, keepdims=True)
    return (h - m) / jnp.sqrt(v + EPS) * g + b


def reference_fp32(x, p):
    """Exact PyTorch forward (fp32, biases included)."""
    h = x @ p["w1"] + p["b1"]
    h = jnp.maximum(_bn_ref(h, p["g1"], p["be1"]), 0.0)
    y = h @ p["w2"] + p["b2"]
    return _bn_ref(y, p["g2"], p["be2"])


def reference_bf16(x, p):
    """Same math with the kernel's bf16-operand / fp32-accumulate matmuls."""
    h = jnp.dot(x.astype(jnp.bfloat16), p["w1"].astype(jnp.bfloat16),
                preferred_element_type=jnp.float32)
    h = jnp.maximum(_bn_ref(h, p["g1"], p["be1"]), 0.0)
    y = jnp.dot(h.astype(jnp.bfloat16), p["w2"].astype(jnp.bfloat16),
                preferred_element_type=jnp.float32)
    return _bn_ref(y, p["g2"], p["be2"])


if __name__ == "__main__":
    # Small shapes: batch=8, in_dim=64, hidden=512 (2 hidden tiles @ 256), out=128
    N, IN_DIM, HIDDEN, OUT = 8, 64, 512, 128

    key = jax.random.PRNGKey(0)
    kx, kp = jax.random.split(key)
    x = jax.random.normal(kx, (N, IN_DIM), jnp.float32)
    params = init_params(kp, IN_DIM, HIDDEN, OUT)

    prepped = preprocess_params(params, tile_h=256)   # one-time weight pad + cast
    out = jax.block_until_ready(projection_mlp(x, prepped))
    assert out.shape == (N, OUT)

    # Tight check vs. the bf16-matmul-matched reference.
    ref_b = reference_bf16(x, params)
    assert jnp.allclose(out, ref_b, atol=2e-3, rtol=2e-3), "mismatch vs. bf16 reference"

    # Looser check vs. the exact fp32 PyTorch-semantics reference (with biases,
    # which training-mode BN cancels) to confirm end-to-end forward semantics.
    ref_f = reference_fp32(x, params)
    assert jnp.allclose(out, ref_f, atol=6e-2, rtol=6e-2), "mismatch vs. fp32 reference"

    print("KERNEL_OK")
</pallas_src>

<mosaic_0001>
module attributes {stable_mosaic.version = 11 : i64} {
  func.func @projection_mlp_kernel(%arg0: i32, %arg1: memref<8x64xf32, #tpu.memory_space<vmem>>, %arg2: memref<64x256xbf16, #tpu.memory_space<vmem>>, %arg3: memref<1x256xf32, #tpu.memory_space<vmem>>, %arg4: memref<1x256xf32, #tpu.memory_space<vmem>>, %arg5: memref<256x128xbf16, #tpu.memory_space<vmem>>, %arg6: memref<1x128xf32, #tpu.memory_space<vmem>>, %arg7: memref<1x128xf32, #tpu.memory_space<vmem>>, %arg8: memref<8x128xf32, #tpu.memory_space<vmem>>) attributes {dimension_semantics = [#tpu.dimension_semantics<arbitrary>], iteration_bounds = array<i64: 2>, scalar_prefetch = 0 : i64, scratch_operands = 0 : i64, tpu.core_type = #tpu.core_type<tc>, window_params = [{pipeline_mode = #tpu.pipeline_mode<synchronous>, transform_indices = @transform_0, window_bounds = array<i64: 8, 64>}, {transform_indices = @transform_1, window_bounds = array<i64: 64, 256>}, {transform_indices = @transform_2, window_bounds = array<i64: 1, 256>}, {transform_indices = @transform_3, window_bounds = array<i64: 1, 256>}, {transform_indices = @transform_4, window_bounds = array<i64: 256, 128>}, {pipeline_mode = #tpu.pipeline_mode<synchronous>, transform_indices = @transform_5, window_bounds = array<i64: 1, 128>}, {pipeline_mode = #tpu.pipeline_mode<synchronous>, transform_indices = @transform_6, window_bounds = array<i64: 1, 128>}, {pipeline_mode = #tpu.pipeline_mode<synchronous>, transform_indices = @transform_7, window_bounds = array<i64: 8, 128>}]} {
    %c0 = arith.constant 0 : index
    %c0_0 = arith.constant 0 : index
    %0 = vector.load %arg1[%c0, %c0_0] : memref<8x64xf32, #tpu.memory_space<vmem>>, vector<8x64xf32>
    %1 = arith.truncf %0 : vector<8x64xf32> to vector<8x64xbf16>
    %c0_1 = arith.constant 0 : index
    %c0_2 = arith.constant 0 : index
    %2 = vector.load %arg2[%c0_1, %c0_2] : memref<64x256xbf16, #tpu.memory_space<vmem>>, vector<64x256xbf16>
    %cst = arith.constant dense<0.000000e+00> : vector<8x256xf32>
    %3 = tpu.matmul %1, %2, %cst {dimension_numbers = #tpu.dot_dimension_numbers<[1], [0], [0], [1], [0, 0, 1, 1], [], []>} : vector<8x64xbf16>, vector<64x256xbf16>, vector<8x256xf32> -> vector<8x256xf32>
    %c0_3 = arith.constant 0 : index
    %c0_4 = arith.constant 0 : index
    %4 = vector.load %arg3[%c0_3, %c0_4] : memref<1x256xf32, #tpu.memory_space<vmem>>, vector<1x256xf32>
    %c0_5 = arith.constant 0 : index
    %c0_6 = arith.constant 0 : index
    %5 = vector.load %arg4[%c0_5, %c0_6] : memref<1x256xf32, #tpu.memory_space<vmem>>, vector<1x256xf32>
    %cst_7 = arith.constant dense<0.000000e+00> : vector<256xf32>
    %6 = vector.multi_reduction <add>, %3, %cst_7 [0] : vector<8x256xf32> to vector<256xf32>
    %7 = vector.shape_cast %6 : vector<256xf32> to vector<1x256xf32>
    %cst_8 = arith.constant 8.000000e+00 : f32
    %8 = vector.broadcast %cst_8 : f32 to vector<1x256xf32>
    %9 = arith.divf %7, %8 : vector<1x256xf32>
    %10 = vector.broadcast %9 : vector<1x256xf32> to vector<8x256xf32>
    %11 = arith.subf %3, %10 : vector<8x256xf32>
    %12 = arith.mulf %11, %11 : vector<8x256xf32>
    %cst_9 = arith.constant dense<0.000000e+00> : vector<256xf32>
    %13 = vector.multi_reduction <add>, %12, %cst_9 [0] : vector<8x256xf32> to vector<256xf32>
    %14 = vector.shape_cast %13 : vector<256xf32> to vector<1x256xf32>
    %cst_10 = arith.constant 8.000000e+00 : f32
    %15 = vector.broadcast %cst_10 : f32 to vector<1x256xf32>
    %16 = arith.divf %14, %15 : vector<1x256xf32>
    %cst_11 = arith.constant 9.99999974E-6 : f32
    %17 = vector.broadcast %cst_11 : f32 to vector<1x256xf32>
    %18 = arith.addf %16, %17 : vector<1x256xf32>
    %19 = math.rsqrt %18 : vector<1x256xf32>
    %20 = arith.mulf %4, %19 : vector<1x256xf32>
    %21 = arith.mulf %9, %20 : vector<1x256xf32>
    %22 = arith.subf %5, %21 : vector<1x256xf32>
    %23 = vector.broadcast %20 : vector<1x256xf32> to vector<8x256xf32>
    %24 = arith.mulf %3, %23 : vector<8x256xf32>
    %25 = vector.broadcast %22 : vector<1x256xf32> to vector<8x256xf32>
    %26 = arith.addf %24, %25 : vector<8x256xf32>
    %cst_12 = arith.constant 0.000000e+00 : f32
    %27 = vector.broadcast %cst_12 : f32 to vector<8x256xf32>
    %28 = arith.maximumf %26, %27 : vector<8x256xf32>
    %29 = arith.truncf %28 : vector<8x256xf32> to vector<8x256xbf16>
    %c0_13 = arith.constant 0 : index
    %c0_14 = arith.constant 0 : index
    %30 = vector.load %arg5[%c0_13, %c0_14] : memref<256x128xbf16, #tpu.memory_space<vmem>>, vector<256x128xbf16>
    %cst_15 = arith.constant dense<0.000000e+00> : vector<8x128xf32>
    %31 = tpu.matmul %29, %30, %cst_15 {dimension_numbers = #tpu.dot_dimension_numbers<[1], [0], [0], [1], [0, 0, 1, 1], [], []>} : vector<8x256xbf16>, vector<256x128xbf16>, vector<8x128xf32> -> vector<8x128xf32>
    %c0_i32 = arith.constant 0 : i32
    %32 = arith.cmpi eq, %arg0, %c0_i32 : i32
    %33 = arith.extui %32 : i1 to i32
    %c0_i32_16 = arith.constant 0 : i32
    %34 = arith.cmpi ne, %33, %c0_i32_16 : i32
    scf.if %34 {
      %c0_20 = arith.constant 0 : index
      %c0_21 = arith.constant 0 : index
      %41 = vector.load %arg8[%c0_20, %c0_21] : memref<8x128xf32, #tpu.memory_space<vmem>>, vector<8x128xf32>
      tpu.vector_store %arg8[%c0_20, %c0_21], %31 {strides = array<i32>} : memref<8x128xf32, #tpu.memory_space<vmem>>, vector<8x128xf32>,
    } else {
    }
    %c0_i32_17 = arith.constant 0 : i32
    %35 = arith.cmpi sgt, %arg0, %c0_i32_17 : i32
    %36 = arith.extui %35 : i1 to i32
    %c0_i32_18 = arith.constant 0 : i32
    %37 = arith.cmpi ne, %36, %c0_i32_18 : i32
    scf.if %37 {
      %c0_20 = arith.constant 0 : index
      %c0_21 = arith.constant 0 : index
      %41 = vector.load %arg8[%c0_20, %c0_21] : memref<8x128xf32, #tpu.memory_space<vmem>>, vector<8x128xf32>
      %42 = arith.addf %41, %31 : vector<8x128xf32>
      %c0_22 = arith.constant 0 : index
      %c0_23 = arith.constant 0 : index
      %43 = vector.load %arg8[%c0_22, %c0_23] : memref<8x128xf32, #tpu.memory_space<vmem>>, vector<8x128xf32>
      tpu.vector_store %arg8[%c0_22, %c0_23], %42 {strides = array<i32>} : memref<8x128xf32, #tpu.memory_space<vmem>>, vector<8x128xf32>,
    } else {
    }
    %c1_i32 = arith.constant 1 : i32
    %38 = arith.cmpi eq, %arg0, %c1_i32 : i32
    %39 = arith.extui %38 : i1 to i32
    %c0_i32_19 = arith.constant 0 : i32
    %40 = arith.cmpi ne, %39, %c0_i32_19 : i32
    scf.if %40 {
      %c0_20 = arith.constant 0 : index
      %c0_21 = arith.constant 0 : index
      %41 = vector.load %arg8[%c0_20, %c0_21] : memref<8x128xf32, #tpu.memory_space<vmem>>, vector<8x128xf32>
      %c0_22 = arith.constant 0 : index
      %c0_23 = arith.constant 0 : index
      %42 = vector.load %arg6[%c0_22, %c0_23] : memref<1x128xf32, #tpu.memory_space<vmem>>, vector<1x128xf32>
      %c0_24 = arith.constant 0 : index
      %c0_25 = arith.constant 0 : index
      %43 = vector.load %arg7[%c0_24, %c0_25] : memref<1x128xf32, #tpu.memory_space<vmem>>, vector<1x128xf32>
      %cst_26 = arith.constant dense<0.000000e+00> : vector<128xf32>
      %44 = vector.multi_reduction <add>, %41, %cst_26 [0] : vector<8x128xf32> to vector<128xf32>
      %45 = vector.shape_cast %44 : vector<128xf32> to vector<1x128xf32>
      %cst_27 = arith.constant 8.000000e+00 : f32
      %46 = vector.broadcast %cst_27 : f32 to vector<1x128xf32>
      %47 = arith.divf %45, %46 : vector<1x128xf32>
      %48 = vector.broadcast %47 : vector<1x128xf32> to vector<8x128xf32>
      %49 = arith.subf %41, %48 : vector<8x128xf32>
      %50 = arith.mulf %49, %49 : vector<8x128xf32>
      %cst_28 = arith.constant dense<0.000000e+00> : vector<128xf32>
      %51 = vector.multi_reduction <add>, %50, %cst_28 [0] : vector<8x128xf32> to vector<128xf32>
      %52 = vector.shape_cast %51 : vector<128xf32> to vector<1x128xf32>
      %cst_29 = arith.constant 8.000000e+00 : f32
      %53 = vector.broadcast %cst_29 : f32 to vector<1x128xf32>
      %54 = arith.divf %52, %53 : vector<1x128xf32>
      %cst_30 = arith.constant 9.99999974E-6 : f32
      %55 = vector.broadcast %cst_30 : f32 to vector<1x128xf32>
      %56 = arith.addf %54, %55 : vector<1x128xf32>
      %57 = math.rsqrt %56 : vector<1x128xf32>
      %58 = arith.mulf %42, %57 : vector<1x128xf32>
      %59 = arith.mulf %47, %58 : vector<1x128xf32>
      %60 = arith.subf %43, %59 : vector<1x128xf32>
      %61 = vector.broadcast %58 : vector<1x128xf32> to vector<8x128xf32>
      %62 = arith.mulf %41, %61 : vector<8x128xf32>
      %63 = vector.broadcast %60 : vector<1x128xf32> to vector<8x128xf32>
      %64 = arith.addf %62, %63 : vector<8x128xf32>
      %c0_31 = arith.constant 0 : index
      %c0_32 = arith.constant 0 : index
      %65 = vector.load %arg8[%c0_31, %c0_32] : memref<8x128xf32, #tpu.memory_space<vmem>>, vector<8x128xf32>
      tpu.vector_store %arg8[%c0_31, %c0_32], %64 {strides = array<i32>} : memref<8x128xf32, #tpu.memory_space<vmem>>, vector<8x128xf32>,
    } else {
    }
    return
  }
  func.func @transform_0(%arg0: i32) -> (i32, i32) {
    %c0_i32 = arith.constant 0 : i32
    %c0_i32_0 = arith.constant 0 : i32
    %c0_i32_1 = arith.constant 0 : i32
    return %c0_i32, %c0_i32_0 : i32, i32
  }
  func.func @transform_1(%arg0: i32) -> (i32, i32) {
    %c0_i32 = arith.constant 0 : i32
    %c0_i32_0 = arith.constant 0 : i32
    return %c0_i32, %arg0 : i32, i32
  }
  func.func @transform_2(%arg0: i32) -> (i32, i32) {
    %c0_i32 = arith.constant 0 : i32
    %c0_i32_0 = arith.constant 0 : i32
    return %c0_i32, %arg0 : i32, i32
  }
  func.func @transform_3(%arg0: i32) -> (i32, i32) {
    %c0_i32 = arith.constant 0 : i32
    %c0_i32_0 = arith.constant 0 : i32
    return %c0_i32, %arg0 : i32, i32
  }
  func.func @transform_4(%arg0: i32) -> (i32, i32) {
    %c0_i32 = arith.constant 0 : i32
    %c0_i32_0 = arith.constant 0 : i32
    return %arg0, %c0_i32 : i32, i32
  }
  func.func @transform_5(%arg0: i32) -> (i32, i32) {
    %c0_i32 = arith.constant 0 : i32
    %c0_i32_0 = arith.constant 0 : i32
    %c0_i32_1 = arith.constant 0 : i32
    return %c0_i32, %c0_i32_0 : i32, i32
  }
  func.func @transform_6(%arg0: i32) -> (i32, i32) {
    %c0_i32 = arith.constant 0 : i32
    %c0_i32_0 = arith.constant 0 : i32
    %c0_i32_1 = arith.constant 0 : i32
    return %c0_i32, %c0_i32_0 : i32, i32
  }
  func.func @transform_7(%arg0: i32) -> (i32, i32) {
    %c0_i32 = arith.constant 0 : i32
    %c0_i32_0 = arith.constant 0 : i32
    %c0_i32_1 = arith.constant 0 : i32
    return %c0_i32, %c0_i32_0 : i32, i32
  }
}

</mosaic_0001>

<llo_original>
// kernel: tpu_custom_call.1
$region0: #{tpu_custom_call.1}
  #allocation0 [shape = 'u32[]', space=smem, size = 0x4, offset = 0x4, fixed_abs, tag = 'smem constant byte address 0x4 - core index']
  #allocation1 [shape = 'u32[144,128]{1,0:T(1,128)}', space=vmem, size = 0x12000, scoped, tag = 'internal scratch']
  %s0 = inlined_call_operand.hbm [shape: f32[8,64], index: 0, kind: input, shape index: {}]
  %s1 = inlined_call_operand.hbm [shape: bf16[64,512], index: 1, kind: input, shape index: {}]
  %s2 = inlined_call_operand.hbm [shape: f32[1,512], index: 2, kind: input, shape index: {}]
  %s3 = inlined_call_operand.vmem [shape: f32[1,512], index: 3, kind: input, shape index: {}]
  %s4 = inlined_call_operand.hbm [shape: bf16[512,128], index: 4, kind: input, shape index: {}]
  %s5 = inlined_call_operand.vmem [shape: f32[1,128], index: 5, kind: input, shape index: {}]
  %s6 = inlined_call_operand.vmem [shape: f32[1,128], index: 6, kind: input, shape index: {}]
  %s7 = inlined_call_operand.hbm [shape: f32[8,128], index: 7, kind: output, shape index: {}]
  %s8 = sld [smem:[#allocation0]]
  $region89: #{tpu_custom_call.1} parent=0
    _
  %s10 = ssub.s32 1, %s8
  %s11 = scalar_select 0, %s10, %s8
  $region1: #{tpu_custom_call.1} parent=0
    #allocation2 [shape = 'u8[4096]{0}', space=vmem, size = 0x1000, scoped, tag = 'input window, operand 0, single buffered']
    #allocation3 [shape = 's32[2]{0}', space=sflag, size = 0x8, scoped, tag = 'scoped memory for tpu_custom_call.1']
    #allocation4 [shape = 's32[2]{0}', space=sflag, size = 0x8, scoped, tag = 'scoped memory for tpu_custom_call.1']
    #allocation5 [shape = 'u8[65536]{0}', space=vmem, size = 0x10000, scoped, tag = 'input window, operand 1']
    #allocation6 [shape = 's32[2]{0}', space=sflag, size = 0x8, scoped, tag = 'scoped memory for tpu_custom_call.1']
    #allocation7 [shape = 'u8[2048]{0}', space=vmem, size = 0x800, scoped, tag = 'input window, operand 2']
    #allocation8 [shape = 'u8[131072]{0}', space=vmem, size = 0x20000, scoped, tag = 'input window, operand 4']
    #allocation9 [shape = 's32[2]{0}', space=sflag, size = 0x8, scoped, tag = 'scoped memory for tpu_custom_call.1']
    #allocation10 [shape = 'u8[4096]{0}', space=vmem, size = 0x1000, scoped, tag = 'output window, operand 0, single buffered']
    %12 = vsyncpa [#allocation3], 0
    %13 = vsyncpa [#allocation6], 0
    %s14 = scalar_lea.sflag [#allocation6], 1
    %15 = vsyncpa %s14, 0
    %16 = vsyncpa [#allocation9], 0
    %s17 = scalar_lea.sflag [#allocation9], 1
    %18 = vsyncpa %s17, 0
    %19 = vsyncpa [#allocation4], 0
    loop: start=0, step=1, limit=4
    $region2: #{tpu_custom_call.1} parent=1 // loop_pre_header
      _
    $region3: #{tpu_custom_call.1} parent=1 // loop_header
      %s21 = sphi 0, %s25
      %p22 = scmp.ge.s32.totalorder %s21, 4
      %s29 = sphi 0, %s29
      %s31 = sphi 0, %s29
      %s32 = sphi 0, %s31
      %s46 = sphi 0, %s32
      %s52 = sphi 0, %s54
      %s55 = sphi 0, %s52
      %s56 = sphi 0, %s55
      %s72 = sphi 0, %s56
      %s78 = sphi 0, %s80
      %s81 = sphi 0, %s78
      %s82 = sphi 0, %s81
      %s98 = sphi 0, %s82
      %s104 = sphi 0, %s106
      %s107 = sphi 0, %s104
      %s108 = sphi 0, %s107
      %s124 = sphi 0, %s108
      %s130 = sphi 0, %s132
      %s133 = sphi 0, %s130
      %s134 = sphi 0, %s133
      %s150 = sphi 0, %s134
      %s154 = sphi 0, %s154
      %s156 = sphi 0, %s154
      %s157 = sphi 0, %s156
      %s171 = sphi 0, %s157
      %s175 = sphi 0, %s175
      %s177 = sphi 0, %s175
      %s178 = sphi 0, %s177
      %s192 = sphi 0, %s178
      %s196 = sphi 0, %s196
      %s198 = sphi 0, %s196
      %s199 = sphi 0, %s198
      %s213 = sphi 0, %s199
    $region4: #{tpu_custom_call.1} parent=1 // loop_header_branch
      %24 = sbr.rel (%p22) target = $region8
    $region5: #{tpu_custom_call.1} parent=1 // loop_body
      %s26 = ssub.s32 %s21, 1
      %s27 = ssub.s32 %s21, 2
      %s28 = sadd.s32 %s21, 1
      %s30 = sadd.s32 %s29, 1
      %p33 = scmp.eq.s32.totalorder %s21, 1
      %p34 = scmp.ne.s32.totalorder %s29, %s31
      %p35 = scmp.eq.s32.totalorder %s21, 0
      %p36 = por %p34, %p35
      %p37 = scmp.ne.s32.totalorder %s29, %s31
      %p38 = scmp.eq.s32.totalorder %s26, 1
      %p39 = por %p37, %p38
      %p40 = scmp.ne.s32.totalorder %s31, %s32
      %p41 = scmp.eq.s32.totalorder %s26, 0
      %p42 = por %p40, %p41
      %p43 = scmp.ne.s32.totalorder %s31, %s32
      %p44 = scmp.eq.s32.totalorder %s27, 1
      %p45 = por %p43, %p44
      %p47 = scmp.ne.s32.totalorder %s32, %s46
      %p48 = scmp.eq.s32.totalorder %s27, 0
      %p49 = por %p47, %p48
      %s50 = ssub.s32 %s21, %s28
      %p51 = scmp.eq.s32.totalorder %s50, 0
      %s53 = sadd.s32 %s52, 1
      %s54 = scalar_select %p51, %s52, %s53
      %p57 = pneg %p51
      %p58 = scmp.eq.s32.totalorder %s21, 1
      %p59 = por %p57, %p58
      %p60 = scmp.ne.s32.totalorder %s52, %s55
      %p61 = scmp.eq.s32.totalorder %s21, 0
      %p62 = por %p60, %p61
      %p63 = scmp.ne.s32.totalorder %s52, %s55
      %p64 = scmp.eq.s32.totalorder %s26, 1
      %p65 = por %p63, %p64
      %p66 = scmp.ne.s32.totalorder %s55, %s56
      %p67 = scmp.eq.s32.totalorder %s26, 0
      %p68 = por %p66, %p67
      %p69 = scmp.ne.s32.totalorder %s55, %s56
      %p70 = scmp.eq.s32.totalorder %s27, 1
      %p71 = por %p69, %p70
      %p73 = scmp.ne.s32.totalorder %s56, %s72
      %p74 = scmp.eq.s32.totalorder %s27, 0
      %p75 = por %p73, %p74
      %s76 = ssub.s32 %s21, %s28
      %p77 = scmp.eq.s32.totalorder %s76, 0
      %s79 = sadd.s32 %s78, 1
      %s80 = scalar_select %p77, %s78, %s79
      %p83 = pneg %p77
      %p84 = scmp.eq.s32.totalorder %s21, 1
      %p85 = por %p83, %p84
      %p86 = scmp.ne.s32.totalorder %s78, %s81
      %p87 = scmp.eq.s32.totalorder %s21, 0
      %p88 = por %p86, %p87
      %p89 = scmp.ne.s32.totalorder %s78, %s81
      %p90 = scmp.eq.s32.totalorder %s26, 1
      %p91 = por %p89, %p90
      %p92 = scmp.ne.s32.totalorder %s81, %s82
      %p93 = scmp.eq.s32.totalorder %s26, 0
      %p94 = por %p92, %p93
      %p95 = scmp.ne.s32.totalorder %s81, %s82
      %p96 = scmp.eq.s32.totalorder %s27, 1
      %p97 = por %p95, %p96
      %p99 = scmp.ne.s32.totalorder %s82, %s98
      %p100 = scmp.eq.s32.totalorder %s27, 0
      %p101 = por %p99, %p100
      %s102 = ssub.s32 %s21, %s28
      %p103 = scmp.eq.s32.totalorder %s102, 0
      %s105 = sadd.s32 %s104, 1
      %s106 = scalar_select %p103, %s104, %s105
      %p109 = pneg %p103
      %p110 = scmp.eq.s32.totalorder %s21, 1
      %p111 = por %p109, %p110
      %p112 = scmp.ne.s32.totalorder %s104, %s107
      %p113 = scmp.eq.s32.totalorder %s21, 0
      %p114 = por %p112, %p113
      %p115 = scmp.ne.s32.totalorder %s104, %s107
      %p116 = scmp.eq.s32.totalorder %s26, 1
      %p117 = por %p115, %p116
      %p118 = scmp.ne.s32.totalorder %s107, %s108
      %p119 = scmp.eq.s32.totalorder %s26, 0
      %p120 = por %p118, %p119
      %p121 = scmp.ne.s32.totalorder %s107, %s108
      %p122 = scmp.eq.s32.totalorder %s27, 1
      %p123 = por %p121, %p122
      %p125 = scmp.ne.s32.totalorder %s108, %s124
      %p126 = scmp.eq.s32.totalorder %s27, 0
      %p127 = por %p125, %p126
      %s128 = ssub.s32 %s21, %s28
      %p129 = scmp.eq.s32.totalorder %s128, 0
      %s131 = sadd.s32 %s130, 1
      %s132 = scalar_select %p129, %s130, %s131
      %p135 = pneg %p129
      %p136 = scmp.eq.s32.totalorder %s21, 1
      %p137 = por %p135, %p136
      %p138 = scmp.ne.s32.totalorder %s130, %s133
      %p139 = scmp.eq.s32.totalorder %s21, 0
      %p140 = por %p138, %p139
      %p141 = scmp.ne.s32.totalorder %s130, %s133
      %p142 = scmp.eq.s32.totalorder %s26, 1
      %p143 = por %p141, %p142
      %p144 = scmp.ne.s32.totalorder %s133, %s134
      %p145 = scmp.eq.s32.totalorder %s26, 0
      %p146 = por %p144, %p145
      %p147 = scmp.ne.s32.totalorder %s133, %s134
      %p148 = scmp.eq.s32.totalorder %s27, 1
      %p149 = por %p147, %p148
      %p151 = scmp.ne.s32.totalorder %s134, %s150
      %p152 = scmp.eq.s32.totalorder %s27, 0
      %p153 = por %p151, %p152
      %s155 = sadd.s32 %s154, 1
      %p158 = scmp.eq.s32.totalorder %s21, 1
      %p159 = scmp.ne.s32.totalorder %s154, %s156
      %p160 = scmp.eq.s32.totalorder %s21, 0
      %p161 = por %p159, %p160
      %p162 = scmp.ne.s32.totalorder %s154, %s156
      %p163 = scmp.eq.s32.totalorder %s26, 1
      %p164 = por %p162, %p163
      %p165 = scmp.ne.s32.totalorder %s156, %s157
      %p166 = scmp.eq.s32.totalorder %s26, 0
      %p167 = por %p165, %p166
      %p168 = scmp.ne.s32.totalorder %s156, %s157
      %p169 = scmp.eq.s32.totalorder %s27, 1
      %p170 = por %p168, %p169
      %p172 = scmp.ne.s32.totalorder %s157, %s171
      %p173 = scmp.eq.s32.totalorder %s27, 0
      %p174 = por %p172, %p173
      %s176 = sadd.s32 %s175, 1
      %p179 = scmp.eq.s32.totalorder %s21, 1
      %p180 = scmp.ne.s32.totalorder %s175, %s177
      %p181 = scmp.eq.s32.totalorder %s21, 0
      %p182 = por %p180, %p181
      %p183 = scmp.ne.s32.totalorder %s175, %s177
      %p184 = scmp.eq.s32.totalorder %s26, 1
      %p185 = por %p183, %p184
      %p186 = scmp.ne.s32.totalorder %s177, %s178
      %p187 = scmp.eq.s32.totalorder %s26, 0
      %p188 = por %p186, %p187
      %p189 = scmp.ne.s32.totalorder %s177, %s178
      %p190 = scmp.eq.s32.totalorder %s27, 1
      %p191 = por %p189, %p190
      %p193 = scmp.ne.s32.totalorder %s178, %s192
      %p194 = scmp.eq.s32.totalorder %s27, 0
      %p195 = por %p193, %p194
      %s197 = sadd.s32 %s196, 1
      %p200 = scmp.eq.s32.totalorder %s21, 1
      %p201 = scmp.ne.s32.totalorder %s196, %s198
      %p202 = scmp.eq.s32.totalorder %s21, 0
      %p203 = por %p201, %p202
      %p204 = scmp.ne.s32.totalorder %s196, %s198
      %p205 = scmp.eq.s32.totalorder %s26, 1
      %p206 = por %p204, %p205
      %p207 = scmp.ne.s32.totalorder %s198, %s199
      %p208 = scmp.eq.s32.totalorder %s26, 0
      %p209 = por %p207, %p208
      %p210 = scmp.ne.s32.totalorder %s198, %s199
      %p211 = scmp.eq.s32.totalorder %s27, 1
      %p212 = por %p210, %p211
      %p214 = scmp.ne.s32.totalorder %s199, %s213
      %p215 = scmp.eq.s32.totalorder %s27, 0
      %p216 = por %p214, %p215
      %p217 = scmp.le.s32.totalorder 1, %s21
      %p218 = scmp.lt.s32.totalorder %s21, 3
      %p219 = pnand %p217, %p218
      %p220 = pneg %p219
      // Predicated region
      $region9: #{tpu_custom_call.1} parent=5 // pred_check
        _
      $region10: #{tpu_custom_call.1} parent=5 // pred_check_branch
        %222 = sbr.rel (%p219) target = $region12
      $region11: #{tpu_custom_call.1} parent=5 // pred_region
        %s223 = ssub.s32 %s21, 1
        // Predicated region
        $region13: #{tpu_custom_call.1} parent=11 // pred_check
          %p224 = pneg %p42
        $region14: #{tpu_custom_call.1} parent=11 // pred_check_branch
          %226 = sbr.rel (%p224) target = $region16
        $region15: #{tpu_custom_call.1} parent=11 // pred_region
          %s228 = ssub.s32 128, 128
          %229 = vsyncadd [#allocation3], %s228
          %s231 = sshll.u32 [#allocation2], 4
          %s232 = int_to_ptr.vmem [resolvable:$true] %s231
          %234 = dma.hbm_to_vmem [thread:$0]  %s0, 128, %s232, [#allocation3]
        $region16: #{tpu_custom_call.1} parent=11 // pred_fallthru
          _
        // Predicated region
        $region17: #{tpu_custom_call.1} parent=11 // pred_check
          %p235 = pneg %p167
        $region18: #{tpu_custom_call.1} parent=11 // pred_check_branch
          %237 = sbr.rel (%p235) target = $region20
        $region19: #{tpu_custom_call.1} parent=11 // pred_region
          _
        $region20: #{tpu_custom_call.1} parent=11 // pred_fallthru
          _
        // Predicated region
        $region21: #{tpu_custom_call.1} parent=11 // pred_check
          %p238 = pneg %p188
        $region22: #{tpu_custom_call.1} parent=11 // pred_check_branch
          %240 = sbr.rel (%p238) target = $region24
        $region23: #{tpu_custom_call.1} parent=11 // pred_region
          _
        $region24: #{tpu_custom_call.1} parent=11 // pred_fallthru
          _
      $region12: #{tpu_custom_call.1} parent=5 // pred_fallthru
        _
      %p241 = scmp.lt.s32.totalorder %s21, 2
      // Predicated region
      $region25: #{tpu_custom_call.1} parent=5 // pred_check
        %p242 = pneg %p241
      $region26: #{tpu_custom_call.1} parent=5 // pred_check_branch
        %244 = sbr.rel (%p242) target = $region28
      $region27: #{tpu_custom_call.1} parent=5 // pred_region
        // Predicated region
        $region29: #{tpu_custom_call.1} parent=27 // pred_check
          %p245 = pneg %p62
        $region30: #{tpu_custom_call.1} parent=27 // pred_check_branch
          %247 = sbr.rel (%p245) target = $region32
        $region31: #{tpu_custom_call.1} parent=27 // pred_region
          %s248 = sand.u32 %s21, 1
          %s249 = scalar_lea.sflag [#allocation6], %s248
          %s250 = sand.u32 %s52, 1
          %s251 = smul.addr %s250, 64
          %s252 = scalar_lea.vmem [#allocation5], %s251
          %s253 = smul.u32 2, %s21
          %s255 = ssub.s32 1024, 1024
          %256 = vsyncadd %s249, %s255
          %s257 = smul.addr %s253, 64
          %s258 = scalar_lea.hbm %s1, %s257
          %s259 = sshll.u32 %s252, 4
          %s260 = int_to_ptr.vmem [resolvable:$true] %s259
          %265 = dma.hbm_to_vmem [thread:$0]  %s258, 1024, %s260, %s249, 256, 128, 8
        $region32: #{tpu_custom_call.1} parent=27 // pred_fallthru
          _
        // Predicated region
        $region33: #{tpu_custom_call.1} parent=27 // pred_check
          %p266 = pneg %p88
        $region34: #{tpu_custom_call.1} parent=27 // pred_check_branch
          %268 = sbr.rel (%p266) target = $region36
        $region35: #{tpu_custom_call.1} parent=27 // pred_region
          %s269 = sand.u32 %s21, 1
          %s270 = scalar_lea.sflag [#allocation6], %s269
          %s271 = sand.u32 %s78, 1
          %s272 = smul.addr %s271, 2
          %s273 = scalar_lea.vmem [#allocation7], %s272
          %s274 = smul.u32 2, %s21
          %s276 = ssub.s32 32, 32
          %277 = vsyncadd %s270, %s276
          %s278 = smul.addr %s274, 16
          %s279 = scalar_lea.hbm %s2, %s278
          %s281 = sshll.u32 %s273, 4
          %s282 = int_to_ptr.vmem [resolvable:$true] %s281
          %284 = dma.hbm_to_vmem [thread:$0]  %s279, 32, %s282, %s270
        $region36: #{tpu_custom_call.1} parent=27 // pred_fallthru
          _
        // Predicated region
        $region37: #{tpu_custom_call.1} parent=27 // pred_check
          %p285 = pneg %p114
        $region38: #{tpu_custom_call.1} parent=27 // pred_check_branch
          %287 = sbr.rel (%p285) target = $region40
        $region39: #{tpu_custom_call.1} parent=27 // pred_region
          %s288 = smul.u32 2, %s21
          %p289 = scmp.lt.s32.totalorder %s288, 3
          %s290 = scalar_select %p289, %s288, 3
          %s291 = scalar_lea.vmem %s3, %s290
          %s292 = smul.u32 2, %s21
        $region40: #{tpu_custom_call.1} parent=27 // pred_fallthru
          _
        // Predicated region
        $region41: #{tpu_custom_call.1} parent=27 // pred_check
          %p293 = pneg %p140
        $region42: #{tpu_custom_call.1} parent=27 // pred_check_branch
          %295 = sbr.rel (%p293) target = $region44
        $region43: #{tpu_custom_call.1} parent=27 // pred_region
          %s296 = sand.u32 %s130, 1
          %s297 = scalar_lea.sflag [#allocation9], %s296
          %s298 = sand.u32 %s130, 1
          %s299 = smul.addr %s298, 128
          %s300 = scalar_lea.vmem [#allocation8], %s299
          %s301 = smul.u32 32, %s21
          %s303 = ssub.s32 2048, 2048
          %304 = vsyncadd %s297, %s303
          %s305 = smul.addr %s301, 64
          %s306 = scalar_lea.hbm %s4, %s305
          %s307 = sshll.u32 %s300, 4
          %s308 = int_to_ptr.vmem [resolvable:$true] %s307
          %313 = dma.hbm_to_vmem [thread:$0]  %s306, 2048, %s308, %s297, 64, 64, 4
        $region44: #{tpu_custom_call.1} parent=27 // pred_fallthru
          _
      $region28: #{tpu_custom_call.1} parent=5 // pred_fallthru
        _
      %p314 = scmp.le.s32.totalorder 1, %s21
      %p315 = scmp.lt.s32.totalorder %s21, 3
      %p316 = pnand %p314, %p315
      %p317 = pneg %p316
      // Predicated region
      $region45: #{tpu_custom_call.1} parent=5 // pred_check
        _
      $region46: #{tpu_custom_call.1} parent=5 // pred_check_branch
        %319 = sbr.rel (%p316) target = $region48
      $region47: #{tpu_custom_call.1} parent=5 // pred_region
        %s320 = ssub.s32 %s21, 1
        // Predicated region
        $region49: #{tpu_custom_call.1} parent=47 // pred_check
          %p321 = pneg %p42
        $region50: #{tpu_custom_call.1} parent=47 // pred_check_branch
          %323 = sbr.rel (%p321) target = $region52
        $region51: #{tpu_custom_call.1} parent=47 // pred_region
          %324 = dma.done [#allocation3], 128
        $region52: #{tpu_custom_call.1} parent=47 // pred_fallthru
          _
        %s325 = sand.u32 %s26, 1
        %s326 = scalar_lea.sflag [#allocation6], %s325
        %s327 = sand.u32 %s55, 1
        %s328 = smul.addr %s327, 64
        %s329 = scalar_lea.vmem [#allocation5], %s328
        // Predicated region
        $region53: #{tpu_custom_call.1} parent=47 // pred_check
          %p330 = pneg %p68
        $region54: #{tpu_custom_call.1} parent=47 // pred_check_branch
          %332 = sbr.rel (%p330) target = $region56
        $region55: #{tpu_custom_call.1} parent=47 // pred_region
          %333 = dma.done %s326, 1024
        $region56: #{tpu_custom_call.1} parent=47 // pred_fallthru
          _
        %s334 = sand.u32 %s26, 1
        %s335 = scalar_lea.sflag [#allocation6], %s334
        %s336 = sand.u32 %s81, 1
        %s337 = smul.addr %s336, 2
        %s338 = scalar_lea.vmem [#allocation7], %s337
        // Predicated region
        $region57: #{tpu_custom_call.1} parent=47 // pred_check
          %p339 = pneg %p94
        $region58: #{tpu_custom_call.1} parent=47 // pred_check_branch
          %341 = sbr.rel (%p339) target = $region60
        $region59: #{tpu_custom_call.1} parent=47 // pred_region
          %342 = dma.done %s335, 32
        $region60: #{tpu_custom_call.1} parent=47 // pred_fallthru
          _
        %s343 = sand.u32 %s133, 1
        %s344 = scalar_lea.sflag [#allocation9], %s343
        %s345 = sand.u32 %s133, 1
        %s346 = smul.addr %s345, 128
        %s347 = scalar_lea.vmem [#allocation8], %s346
        // Predicated region
        $region61: #{tpu_custom_call.1} parent=47 // pred_check
          %p348 = pneg %p146
        $region62: #{tpu_custom_call.1} parent=47 // pred_check_branch
          %350 = sbr.rel (%p348) target = $region64
        $region63: #{tpu_custom_call.1} parent=47 // pred_region
          %351 = dma.done %s344, 2048
        $region64: #{tpu_custom_call.1} parent=47 // pred_fallthru
          _
        %p352 = pneg %p42
        %p353 = pneg %p39
        %s354 = sand.u32 %s26, 1
        %s355 = scalar_lea.sflag [#allocation6], %s354
        %s356 = sand.u32 %s55, 1
        %s357 = smul.addr %s356, 64
        %s358 = scalar_lea.vmem [#allocation5], %s357
        %p359 = pneg %p68
        %p360 = pneg %p65
        %s361 = sand.u32 %s26, 1
        %s362 = scalar_lea.sflag [#allocation6], %s361
        %s363 = sand.u32 %s81, 1
        %s364 = smul.addr %s363, 2
        %s365 = scalar_lea.vmem [#allocation7], %s364
        %p366 = pneg %p94
        %p367 = pneg %p91
        %s368 = smul.u32 2, %s26
        %p369 = scmp.lt.s32.totalorder %s368, 3
        %s370 = scalar_select %p369, %s368, 3
        %s371 = scalar_lea.vmem %s3, %s370
        %p372 = pneg %p120
        %p373 = pneg %p117
        %s374 = sand.u32 %s133, 1
        %s375 = scalar_lea.sflag [#allocation9], %s374
        %s376 = sand.u32 %s133, 1
        %s377 = smul.addr %s376, 128
        %s378 = scalar_lea.vmem [#allocation8], %s377
        %p379 = pneg %p146
        %p380 = pneg %p143
        %p381 = pneg %p167
        %p382 = pneg %p164
        %p383 = pneg %p188
        %p384 = pneg %p185
        %p385 = pneg %p209
        %p386 = pneg %p206
        %s387 = smul.u32 2, %s26
        %s388 = smul.u32 2, %s26
        %s389 = smul.u32 2, %s26
        %p390 = scmp.lt.s32.totalorder %s389, 3
        %s391 = scalar_select %p390, %s389, 3
        %s392 = scalar_lea.vmem %s3, %s391
        %s393 = smul.u32 2, %s26
        %s394 = smul.u32 32, %s26
        %v396 = vld [vmem:[#allocation2] sm:$0xff]
        %v397 = vpack.c.bf16 %v396, %v396
        %v398 = vld [vmem:[%s329] sm:$0xff]
        %v399 = vld [vmem:[%s329 + $0x8] sm:$0xff]
        %v400 = vld [vmem:[%s329 + $0x10] sm:$0xff]
        %v401 = vld [vmem:[%s329 + $0x18] sm:$0xff]
        %v402 = vld [vmem:[%s329 + $0x20] sm:$0xff]
        %v403 = vld [vmem:[%s329 + $0x28] sm:$0xff]
        %v404 = vld [vmem:[%s329 + $0x30] sm:$0xff]
        %v405 = vld [vmem:[%s329 + $0x38] sm:$0xff]
        %v414 = vunpack.c.l.b16 %v398
        %v415 = vunpack.c.h.b16 %v398
        %v416 = vunpack.c.l.b16 %v399
        %v417 = vunpack.c.h.b16 %v399
        %v418 = vunpack.c.l.b16 %v400
        %v419 = vunpack.c.h.b16 %v400
        %v420 = vunpack.c.l.b16 %v401
        %v421 = vunpack.c.h.b16 %v401
        %v422 = vunpack.c.l.b16 %v402
        %v423 = vunpack.c.h.b16 %v402
        %v424 = vunpack.c.l.b16 %v403
        %v425 = vunpack.c.h.b16 %v403
        %v426 = vunpack.c.l.b16 %v404
        %v427 = vunpack.c.h.b16 %v404
        %v428 = vunpack.c.l.b16 %v405
        %v429 = vunpack.c.h.b16 %v405
        %v430 = vpack.c.b16 %v416, %v414
        %v431 = vpack.c.b16 %v417, %v415
        %v432 = vpack.c.b16 %v420, %v418
        %v433 = vpack.c.b16 %v421, %v419
        %v434 = vpack.c.b16 %v424, %v422
        %v435 = vpack.c.b16 %v425, %v423
        %v436 = vpack.c.b16 %v428, %v426
        %v437 = vpack.c.b16 %v429, %v427
        %vm446 = vcmask 523264
        %v448 = vsel %vm446, %v397, 0
        %450 = vmatprep.subr.bf16.mxu0 0
        %451 = vmatpush1.bf16.msra.mxu0 0
        %452 = vmatprep.subr.bf16.mxu0 0
        %453 = vmatpush1.bf16.msra.mxu0 0
        %454 = vmatprep.subr.bf16.mxu0 0
        %455 = vmatpush1.bf16.msra.mxu0 0
        %456 = vmatprep.subr.bf16.mxu0 0
        %457 = vmatpush1.bf16.msra.mxu0 0
        %458 = vmatprep.subr.bf16.mxu0 %v437
        %459 = vmatpush1.bf16.msra.mxu0 %v436
        %460 = vmatprep.subr.bf16.mxu0 %v435
        %461 = vmatpush1.bf16.msra.mxu0 %v434
        %462 = vmatprep.subr.bf16.mxu0 %v433
        %463 = vmatpush1.bf16.msra.mxu0 %v432
        %464 = vmatprep.subr.bf16.mxu0 %v431
        %465 = vmatpush1.bf16.msra.mxu0 %v430
        %466 = vmatprep.subr.bf16.mxu0 0
        %467 = vmatpush2.bf16.msra.mxu0 0
        %468 = vmatprep.subr.bf16.mxu0 0
        %469 = vmatpush2.bf16.msra.mxu0 0
        %470 = vmatprep.subr.bf16.mxu0 0
        %471 = vmatpush2.bf16.msra.mxu0 0
        %472 = vmatprep.subr.bf16.mxu0 0
        %473 = vmatpush2.bf16.msra.mxu0 0
        %474 = vmatprep.subr.bf16.mxu0 0
        %475 = vmatpush2.bf16.msra.mxu0 0
        %476 = vmatprep.subr.bf16.mxu0 0
        %477 = vmatpush2.bf16.msra.mxu0 0
        %478 = vmatprep.subr.bf16.mxu0 0
        %479 = vmatpush2.bf16.msra.mxu0 0
        %480 = vmatprep.subr.bf16.mxu0 0
        %481 = vmatpush2.bf16.msra.mxu0 0
        %482 = vmatprep.mubr.bf16.mxu0 0
        %483 = vmatmul.mubr.bf16.gmra.mxu0 %v448
        %v484 = vpop.f32.mrf.mxu0
        %v485 = vadd.f32 0.0, %v484
        %v486 = vpop.f32.mrf.mxu0
        %v487 = vadd.f32 0.0, %v486
        %v488 = vpop.f32.mrf.mxu0
        %v489 = vpop.f32.mrf.mxu0
        %490 = vdwg.mxu0
        %v491 = vld [vmem:[%s338] sm:$0x3]
        %v492 = vld [vmem:[%s392] sm:$0x3]
        %v493 = vrot.slane %v485, 4
        %v494 = vadd.f32 %v485, %v493
        %v495 = vrot.slane %v494, 2
        %v496 = vadd.f32 %v494, %v495
        %v497 = vrot.slane %v496, 1
        %v498 = vadd.f32 %v496, %v497
        %v499 = vrot.slane %v487, 4
        %v500 = vadd.f32 %v487, %v499
        %v501 = vrot.slane %v500, 2
        %v502 = vadd.f32 %v500, %v501
        %v503 = vrot.slane %v502, 1
        %v504 = vadd.f32 %v502, %v503
        %v505 = vrcp.pop 8.0
        %v506 = vmul.f32 %v498, %v505
        %v507 = vmul.f32 %v504, %v505
        %v508 = vsub.f32 %v485, %v506
        %v509 = vsub.f32 %v487, %v507
        %v510 = vmul.f32 %v508, %v508
        %v511 = vmul.f32 %v509, %v509
        %v512 = vrot.slane %v510, 4
        %v513 = vadd.f32 %v510, %v512
        %v514 = vrot.slane %v513, 2
        %v515 = vadd.f32 %v513, %v514
        %v516 = vrot.slane %v515, 1
        %v517 = vadd.f32 %v515, %v516
        %v518 = vrot.slane %v511, 4
        %v519 = vadd.f32 %v511, %v518
        %v520 = vrot.slane %v519, 2
        %v521 = vadd.f32 %v519, %v520
        %v522 = vrot.slane %v521, 1
        %v523 = vadd.f32 %v521, %v522
        %v524 = vmul.f32 %v517, %v505
        %v525 = vmul.f32 %v523, %v505
        %v526 = vadd.f32 %v524, 1e-05
        %v527 = vadd.f32 %v525, 1e-05
        %v528 = vrsqrt.pop %v526
        %v529 = vrsqrt.pop %v527
        %v532 = vcombine.low %v528, %v529
        %v534 = vunpack.c.l.s4 1966171168
        %v535 = vunpack.c.0.s8 %v534
        %v536 = vlaneseq
        %v537 = vshrl.u32 %v536, 7
        %v538 = vsub.s32 %v535, %v537
        %v539 = vrot.slane %v532, %v538
        %v541 = vunpack.c.l.s4 1966171168
        %v542 = vunpack.c.0.s8 %v541
        %v543 = vlaneseq
        %v544 = vshrl.u32 %v543, 7
        %v545 = vsub.s32 %v542, %v544
        %v546 = vrot.slane %v539, %v545
        %v548 = vmul.f32 %v491, %v546
        %v550 = vlaneseq
        %v551 = vshrl.u32 %v550, 7
        %v552 = vsub.s32 0, %v551
        %v553 = vrot.slane %v548, %v552
        %v554 = vlaneseq
        %v555 = vshrl.u32 %v554, 7
        %v556 = vsub.s32 1, %v555
        %v557 = vrot.slane %v548, %v556
        %v560 = vmul.f32 %v506, %v553
        %v561 = vmul.f32 %v507, %v557
        %v564 = vcombine.low %v560, %v561
        %v566 = vunpack.c.l.s4 1966171168
        %v567 = vunpack.c.0.s8 %v566
        %v568 = vlaneseq
        %v569 = vshrl.u32 %v568, 7
        %v570 = vsub.s32 %v567, %v569
        %v571 = vrot.slane %v564, %v570
        %v573 = vunpack.c.l.s4 1966171168
        %v574 = vunpack.c.0.s8 %v573
        %v575 = vlaneseq
        %v576 = vshrl.u32 %v575, 7
        %v577 = vsub.s32 %v574, %v576
        %v578 = vrot.slane %v571, %v577
        %v580 = vsub.f32 %v492, %v578
        %v581 = vmul.f32 %v485, %v553
        %v582 = vmul.f32 %v487, %v557
        %v584 = vlaneseq
        %v585 = vshrl.u32 %v584, 7
        %v586 = vsub.s32 0, %v585
        %v587 = vrot.slane %v580, %v586
        %v588 = vlaneseq
        %v589 = vshrl.u32 %v588, 7
        %v590 = vsub.s32 1, %v589
        %v591 = vrot.slane %v580, %v590
        %v594 = vadd.f32 %v581, %v587
        %v595 = vadd.f32 %v582, %v591
        %v596 = vmax.f32 %v594, 0.0
        %v597 = vmax.f32 %v595, 0.0
        %v598 = vpack.c.bf16 %v596, %v596
        %v599 = vpack.c.bf16 %v597, %v597
        %v600 = vld [vmem:[%s347] sm:$0xf]
        %v601 = vld [vmem:[%s347 + $0x4] sm:$0xf]
        %v602 = vld [vmem:[%s347 + $0x8] sm:$0xf]
        %v603 = vld [vmem:[%s347 + $0xc] sm:$0xf]
        %v604 = vld [vmem:[%s347 + $0x10] sm:$0xf]
        %v605 = vld [vmem:[%s347 + $0x14] sm:$0xf]
        %v606 = vld [vmem:[%s347 + $0x18] sm:$0xf]
        %v607 = vld [vmem:[%s347 + $0x1c] sm:$0xf]
        %v608 = vld [vmem:[%s347 + $0x20] sm:$0xf]
        %v609 = vld [vmem:[%s347 + $0x24] sm:$0xf]
        %v610 = vld [vmem:[%s347 + $0x28] sm:$0xf]
        %v611 = vld [vmem:[%s347 + $0x2c] sm:$0xf]
        %v612 = vld [vmem:[%s347 + $0x30] sm:$0xf]
        %v613 = vld [vmem:[%s347 + $0x34] sm:$0xf]
        %v614 = vld [vmem:[%s347 + $0x38] sm:$0xf]
        %v615 = vld [vmem:[%s347 + $0x3c] sm:$0xf]
        %v616 = vld [vmem:[%s347 + $0x40] sm:$0xf]
        %v617 = vld [vmem:[%s347 + $0x44] sm:$0xf]
        %v618 = vld [vmem:[%s347 + $0x48] sm:$0xf]
        %v619 = vld [vmem:[%s347 + $0x4c] sm:$0xf]
        %v620 = vld [vmem:[%s347 + $0x50] sm:$0xf]
        %v621 = vld [vmem:[%s347 + $0x54] sm:$0xf]
        %v622 = vld [vmem:[%s347 + $0x58] sm:$0xf]
        %v623 = vld [vmem:[%s347 + $0x5c] sm:$0xf]
        %v624 = vld [vmem:[%s347 + $0x60] sm:$0xf]
        %v625 = vld [vmem:[%s347 + $0x64] sm:$0xf]
        %v626 = vld [vmem:[%s347 + $0x68] sm:$0xf]
        %v627 = vld [vmem:[%s347 + $0x6c] sm:$0xf]
        %v628 = vld [vmem:[%s347 + $0x70] sm:$0xf]
        %v629 = vld [vmem:[%s347 + $0x74] sm:$0xf]
        %v630 = vld [vmem:[%s347 + $0x78] sm:$0xf]
        %v631 = vld [vmem:[%s347 + $0x7c] sm:$0xf]
        %v664 = vunpack.c.l.b16 %v600
        %v665 = vunpack.c.l.b16 %v601
        %v666 = vunpack.c.l.b16 %v602
        %v667 = vunpack.c.l.b16 %v603
        %v668 = vunpack.c.l.b16 %v604
        %v669 = vunpack.c.l.b16 %v605
        %v670 = vunpack.c.l.b16 %v606
        %v671 = vunpack.c.l.b16 %v607
        %v672 = vunpack.c.l.b16 %v608
        %v673 = vunpack.c.l.b16 %v609
        %v674 = vunpack.c.l.b16 %v610
        %v675 = vunpack.c.l.b16 %v611
        %v676 = vunpack.c.l.b16 %v612
        %v677 = vunpack.c.l.b16 %v613
        %v678 = vunpack.c.l.b16 %v614
        %v679 = vunpack.c.l.b16 %v615
        %v680 = vunpack.c.l.b16 %v616
        %v681 = vunpack.c.l.b16 %v617
        %v682 = vunpack.c.l.b16 %v618
        %v683 = vunpack.c.l.b16 %v619
        %v684 = vunpack.c.l.b16 %v620
        %v685 = vunpack.c.l.b16 %v621
        %v686 = vunpack.c.l.b16 %v622
        %v687 = vunpack.c.l.b16 %v623
        %v688 = vunpack.c.l.b16 %v624
        %v689 = vunpack.c.l.b16 %v625
        %v690 = vunpack.c.l.b16 %v626
        %v691 = vunpack.c.l.b16 %v627
        %v692 = vunpack.c.l.b16 %v628
        %v693 = vunpack.c.l.b16 %v629
        %v694 = vunpack.c.l.b16 %v630
        %v695 = vunpack.c.l.b16 %v631
        %v696 = vpack.c.b16 %v665, %v664
        %v697 = vpack.c.b16 %v667, %v666
        %v698 = vpack.c.b16 %v669, %v668
        %v699 = vpack.c.b16 %v671, %v670
        %v700 = vpack.c.b16 %v673, %v672
        %v701 = vpack.c.b16 %v675, %v674
        %v702 = vpack.c.b16 %v677, %v676
        %v703 = vpack.c.b16 %v679, %v678
        %v704 = vpack.c.b16 %v681, %v680
        %v705 = vpack.c.b16 %v683, %v682
        %v706 = vpack.c.b16 %v685, %v684
        %v707 = vpack.c.b16 %v687, %v686
        %v708 = vpack.c.b16 %v689, %v688
        %v709 = vpack.c.b16 %v691, %v690
        %v710 = vpack.c.b16 %v693, %v692
        %v711 = vpack.c.b16 %v695, %v694
        %728 = vmatprep.subr.bf16.mxu0 0
        %729 = vmatpush1.bf16.msra.mxu0 %v703
        %730 = vmatprep.subr.bf16.mxu0 0
        %731 = vmatpush1.bf16.msra.mxu0 %v702
        %732 = vmatprep.subr.bf16.mxu0 0
        %733 = vmatpush1.bf16.msra.mxu0 %v701
        %734 = vmatprep.subr.bf16.mxu0 0
        %735 = vmatpush1.bf16.msra.mxu0 %v700
        %736 = vmatprep.subr.bf16.mxu0 0
        %737 = vmatpush1.bf16.msra.mxu0 %v699
        %738 = vmatprep.subr.bf16.mxu0 0
        %739 = vmatpush1.bf16.msra.mxu0 %v698
        %740 = vmatprep.subr.bf16.mxu0 0
        %741 = vmatpush1.bf16.msra.mxu0 %v697
        %742 = vmatprep.subr.bf16.mxu0 0
        %743 = vmatpush1.bf16.msra.mxu0 %v696
        %744 = vmatprep.subr.bf16.mxu0 0
        %745 = vmatpush2.bf16.msra.mxu0 %v711
        %746 = vmatprep.subr.bf16.mxu0 0
        %747 = vmatpush2.bf16.msra.mxu0 %v710
        %748 = vmatprep.subr.bf16.mxu0 0
        %749 = vmatpush2.bf16.msra.mxu0 %v709
        %750 = vmatprep.subr.bf16.mxu0 0
        %751 = vmatpush2.bf16.msra.mxu0 %v708
        %752 = vmatprep.subr.bf16.mxu0 0
        %753 = vmatpush2.bf16.msra.mxu0 %v707
        %754 = vmatprep.subr.bf16.mxu0 0
        %755 = vmatpush2.bf16.msra.mxu0 %v706
        %756 = vmatprep.subr.bf16.mxu0 0
        %757 = vmatpush2.bf16.msra.mxu0 %v705
        %758 = vmatprep.subr.bf16.mxu0 0
        %759 = vmatpush2.bf16.msra.mxu0 %v704
        %760 = vmatprep.mubr.bf16.mxu0 %v599
        %761 = vmatmul.mubr.bf16.gmra.mxu0 %v598
        %v762 = vpop.f32.mrf.mxu0
        %v763 = vadd.f32 0.0, %v762
        %v764 = vpop.f32.mrf.mxu0
        %v765 = vpop.f32.mrf.mxu0
        %v766 = vpop.f32.mrf.mxu0
        %767 = vdwg.mxu0
        %p768 = scmp.eq.s32.totalorder %s26, 0
        // Predicated region
        $region65: #{tpu_custom_call.1} parent=47 // pred_check
          %p769 = pneg %p768
        $region66: #{tpu_custom_call.1} parent=47 // pred_check_branch
          %771 = sbr.rel (%p769) target = $region68
        $region67: #{tpu_custom_call.1} parent=47 // pred_region
          %772 = vst [vmem:[#allocation10] sm:$0xff] %v763
        $region68: #{tpu_custom_call.1} parent=47 // pred_fallthru
          _
        %p773 = scmp.gt.s32.totalorder %s26, 0
        // Predicated region
        $region69: #{tpu_custom_call.1} parent=47 // pred_check
          %p774 = pneg %p773
        $region70: #{tpu_custom_call.1} parent=47 // pred_check_branch
          %776 = sbr.rel (%p774) target = $region72
        $region71: #{tpu_custom_call.1} parent=47 // pred_region
          %v777 = vld [vmem:[#allocation10] sm:$0xff]
          %v778 = vadd.f32 %v777, %v763
          %779 = vst [vmem:[#allocation10] sm:$0xff] %v778
        $region72: #{tpu_custom_call.1} parent=47 // pred_fallthru
          _
        %p780 = scmp.eq.s32.totalorder %s26, 1
        // Predicated region
        $region73: #{tpu_custom_call.1} parent=47 // pred_check
          %p781 = pneg %p780
        $region74: #{tpu_custom_call.1} parent=47 // pred_check_branch
          %783 = sbr.rel (%p781) target = $region76
        $region75: #{tpu_custom_call.1} parent=47 // pred_region
          %v784 = vld [vmem:[#allocation10] sm:$0xff]
          %v785 = vld [vmem:[%s5] sm:$0x1]
          %v786 = vld [vmem:[%s6] sm:$0x1]
          %v787 = vrot.slane %v784, 4
          %v788 = vadd.f32 %v784, %v787
          %v789 = vrot.slane %v788, 2
          %v790 = vadd.f32 %v788, %v789
          %v791 = vrot.slane %v790, 1
          %v792 = vadd.f32 %v790, %v791
          %v793 = vmul.f32 %v792, %v505
          %v794 = vsub.f32 %v784, %v793
          %v795 = vmul.f32 %v794, %v794
          %v796 = vrot.slane %v795, 4
          %v797 = vadd.f32 %v795, %v796
          %v798 = vrot.slane %v797, 2
          %v799 = vadd.f32 %v797, %v798
          %v800 = vrot.slane %v799, 1
          %v801 = vadd.f32 %v799, %v800
          %v802 = vmul.f32 %v801, %v505
          %v803 = vadd.f32 %v802, 1e-05
          %v804 = vrsqrt.pop %v803
          %v805 = vmul.f32 %v785, %v804
          %v806 = vmul.f32 %v793, %v805
          %v807 = vsub.f32 %v786, %v806
          %v809 = vlaneseq
          %v810 = vshrl.u32 %v809, 7
          %v811 = vsub.s32 0, %v810
          %v812 = vrot.slane %v805, %v811
          %v814 = vmul.f32 %v784, %v812
          %v816 = vlaneseq
          %v817 = vshrl.u32 %v816, 7
          %v818 = vsub.s32 0, %v817
          %v819 = vrot.slane %v807, %v818
          %v821 = vadd.f32 %v814, %v819
          %822 = vst [vmem:[#allocation10] sm:$0xff] %v821
        $region76: #{tpu_custom_call.1} parent=47 // pred_fallthru
          _
        // Predicated region
        $region77: #{tpu_custom_call.1} parent=47 // pred_check
          %p823 = pneg %p206
        $region78: #{tpu_custom_call.1} parent=47 // pred_check_branch
          %825 = sbr.rel (%p823) target = $region80
        $region79: #{tpu_custom_call.1} parent=47 // pred_region
          %s827 = ssub.s32 128, 128
          %828 = vsyncadd [#allocation4], %s827
          %s830 = sshll.u32 [#allocation10], 4
          %s831 = int_to_ptr.vmem [resolvable:$true] %s830
          %833 = dma.vmem_to_hbm [thread:$0]  %s831, 128, %s7, [#allocation4]
        $region80: #{tpu_custom_call.1} parent=47 // pred_fallthru
          _
        // Predicated region
        $region81: #{tpu_custom_call.1} parent=47 // pred_check
          %p834 = pneg %p206
        $region82: #{tpu_custom_call.1} parent=47 // pred_check_branch
          %836 = sbr.rel (%p834) target = $region84
        $region83: #{tpu_custom_call.1} parent=47 // pred_region
          %837 = dma.done [#allocation4], 128
        $region84: #{tpu_custom_call.1} parent=47 // pred_fallthru
          _
      $region48: #{tpu_custom_call.1} parent=5 // pred_fallthru
        _
      %p838 = scmp.le.s32.totalorder 2, %s21
      // Predicated region
      $region85: #{tpu_custom_call.1} parent=5 // pred_check
        %p839 = pneg %p838
      $region86: #{tpu_custom_call.1} parent=5 // pred_check_branch
        %841 = sbr.rel (%p839) target = $region88
      $region87: #{tpu_custom_call.1} parent=5 // pred_region
        %s842 = ssub.s32 %s21, 2
      $region88: #{tpu_custom_call.1} parent=5 // pred_fallthru
        _
    $region6: #{tpu_custom_call.1} parent=1 // loop_footer
      %s25 = sadd.s32 1, %s21
    $region7: #{tpu_custom_call.1} parent=1 // loop_footer_branch
      %20 = sbr.rel target = $region3
    $region8: #{tpu_custom_call.1} parent=1 // loop_exit
      _
    %843 = vsyncpa [#allocation3], 1
    %s844 = scalar_lea.sflag [#allocation3], 1
    %845 = vsyncpa %s844, 1
    %846 = vsyncpa [#allocation6], 1
    %s847 = scalar_lea.sflag [#allocation6], 1
    %848 = vsyncpa %s847, 1
    %849 = vsyncpa [#allocation9], 1
    %s850 = scalar_lea.sflag [#allocation9], 1
    %851 = vsyncpa %s850, 1
    %852 = vsyncpa [#allocation4], 1
    %s853 = scalar_lea.sflag [#allocation4], 1
    %854 = vsyncpa %s853, 1

</llo_original>
